<compile_context>
chip_gen: v5e
topology: v5e:2x2
jax: 0.10.0
libtpu: 0.0.40
codegen_flags: <defaults>
</compile_context>

<pallas_src>
import jax
import jax.numpy as jnp
from jax.experimental import pallas as pl
from jax.experimental.pallas import tpu as pltpu


def _mhsa_kernel(x_ref, q_ref, v_ref, o_ref):
    # x_ref: (bb, S, D)   batch-block of candidate vectors
    # q_ref: (H, D, D)    per-head query matrices (as stored by the module)
    # v_ref: (H, D, Dh)   per-head value matrices
    # o_ref: (bb, S, D)   output block (heads concatenated on the last axis)
    bb, S, D = x_ref.shape
    H, _, Dh = v_ref.shape
    G = H * bb                                        # fused (head, batch) axis

    x = x_ref[...]                                    # (bb, S, D)

    # Replicate x / Q / V over the fused g = h*bb + b axis. These are leading-dim
    # broadcasts + leading-dim merges only (no lane/sublane relayout).
    x_g = jnp.broadcast_to(x[None], (H, bb, S, D)).reshape(G, S, D)
    q_g = jnp.broadcast_to(q_ref[...][:, None], (H, bb, D, D)).reshape(G, D, D)
    v_g = jnp.broadcast_to(v_ref[...][:, None], (H, bb, D, Dh)).reshape(G, D, Dh)

    # (1) Query projection for ALL heads & batch items: one batched matmul.
    temp_g = jnp.einsum('gsd,gde->gse', x_g, q_g,
                        preferred_element_type=jnp.float32)     # (G, S, D)

    # (2) Attention scores for ALL heads: one batched matmul contracting the
    #     LAST axes of both operands (no transpose of x materialized).
    scores = jnp.einsum('gsd,gtd->gst', temp_g, x_g,
                        preferred_element_type=jnp.float32)     # (G, S, S)

    # (3) ONE max-stabilized softmax chain for all heads/batch items.
    m = jnp.max(scores, axis=-1, keepdims=True)
    e = jnp.exp(scores - m)
    denom = jnp.sum(e, axis=-1, keepdims=True)
    r = pl.reciprocal(denom, approx=True)             # EUP slot
    r = r * (2.0 - denom * r)                         # one Newton step
    w = e * r                                         # (G, S, S)

    # (4) Weighted sum over candidates: one batched matmul.
    weighted = jnp.einsum('gst,gtd->gsd', w, x_g,
                          preferred_element_type=jnp.float32)   # (G, S, D)

    # (5) Per-head output projection, batched over g.
    out_g = jnp.einsum('gsd,gdk->gsk', weighted, v_g,
                       preferred_element_type=jnp.float32)      # (G, S, Dh)
    out4 = out_g.reshape(H, bb, S, Dh)                # leading split only

    # (6) Concat over heads = H static lane-offset stores (no lane concat).
    for h in range(H):
        o_ref[:, :, h * Dh:(h + 1) * Dh] = out4[h].astype(o_ref.dtype)


def multihead_self_attention(x, Qs, Vs, *, block_b=None):
    """
    Args:
      x:  (B, S, D)  float32 candidate vectors
      Qs: (H, D, D)  per-head query matrices
      Vs: (H, D, Dh) per-head value matrices, Dh = D // H
    Returns:
      (B, S, D) -- concat of per-head outputs along the last dim
                   (identical to the PyTorch module's forward).
    """
    B, S, D = x.shape
    H, _, Dh = Vs.shape
    assert D == H * Dh

    # Batch-block size: several instances per grid step, grid axis is parallel
    # so v7x's two TensorCores split it once B is large enough.
    if block_b is None:
        block_b = 1
        for cand in (8, 4, 2, 1):
            if cand <= B and B % cand == 0:
                block_b = cand
                break
    assert B % block_b == 0
    grid = (B // block_b,)

    # Advisory cost estimate (per call) so XLA can schedule around this call.
    flops = (2 * H * B * S * D * D          # query projection
             + 2 * H * B * S * S * D        # scores
             + 2 * H * B * S * S * D        # weighted sum
             + 2 * H * B * S * D * Dh)      # output projection
    bytes_accessed = 4 * (x.size + Qs.size + Vs.size + B * S * D)
    transcendentals = H * B * S * S         # exp count

    return pl.pallas_call(
        _mhsa_kernel,
        out_shape=jax.ShapeDtypeStruct((B, S, D), x.dtype),
        grid_spec=pltpu.PrefetchScalarGridSpec(
            num_scalar_prefetch=0,
            grid=grid,
            in_specs=[
                pl.BlockSpec((block_b, S, D), lambda i: (i, 0, 0)),   # x
                pl.BlockSpec((H, D, D), lambda i: (0, 0, 0)),         # Qs (resident)
                pl.BlockSpec((H, D, Dh), lambda i: (0, 0, 0)),        # Vs (resident)
            ],
            out_specs=pl.BlockSpec((block_b, S, D), lambda i: (i, 0, 0)),
        ),
        compiler_params=pltpu.CompilerParams(
            dimension_semantics=("parallel",),
            vmem_limit_bytes=32 * 1024 * 1024,
        ),
        cost_estimate=pl.CostEstimate(
            flops=flops,
            transcendentals=transcendentals,
            bytes_accessed=bytes_accessed,
        ),
    )(x, Qs, Vs)


def _reference(x, Qs, Vs):
    # Pure-JAX reference mirroring the PyTorch forward exactly.
    outs = []
    for i in range(Qs.shape[0]):
        temp = x @ Qs[i]                               # (B, S, D)
        temp2 = jnp.einsum("bsd,btd->bst", temp, x)    # (B, S, S)
        w = jax.nn.softmax(temp2, axis=2)
        weighted = jnp.einsum("bst,btd->bsd", w, x)    # (B, S, D)
        outs.append(weighted @ Vs[i])                  # (B, S, Dh)
    return jnp.concatenate(outs, axis=2)


if __name__ == "__main__":
    # Module config: candidate_vector_dim=32, num_attention_heads=4
    B, S, D, H = 2, 8, 32, 4
    Dh = D // H

    key = jax.random.PRNGKey(0)
    kx, kq, kv = jax.random.split(key, 3)

    x = jax.random.normal(kx, (B, S, D), dtype=jnp.float32)
    # nn.Parameter(torch.empty(...).uniform_(-0.1, 0.1)) analog, deterministic:
    Qs = jax.random.uniform(kq, (H, D, D), minval=-0.1, maxval=0.1, dtype=jnp.float32)
    Vs = jax.random.uniform(kv, (H, D, Dh), minval=-0.1, maxval=0.1, dtype=jnp.float32)

    out = multihead_self_attention(x, Qs, Vs)
    out = jax.block_until_ready(out)

    ref = _reference(x, Qs, Vs)
    assert out.shape == (B, S, D)
    assert jnp.allclose(out, ref, atol=1e-4, rtol=1e-4), "mismatch vs reference"

    print("KERNEL_OK")
</pallas_src>

<mosaic_0001>
module attributes {stable_mosaic.version = 11 : i64} {
  func.func @_mhsa_kernel(%arg0: i32, %arg1: memref<2x8x32xf32, #tpu.memory_space<vmem>>, %arg2: memref<4x32x32xf32, #tpu.memory_space<vmem>>, %arg3: memref<4x32x8xf32, #tpu.memory_space<vmem>>, %arg4: memref<2x8x32xf32, #tpu.memory_space<vmem>>) attributes {dimension_semantics = [#tpu.dimension_semantics<parallel>], iteration_bounds = array<i64: 1>, scalar_prefetch = 0 : i64, scratch_operands = 0 : i64, tpu.core_type = #tpu.core_type<tc>, window_params = [{transform_indices = @transform_0, window_bounds = array<i64: 2, 8, 32>}, {pipeline_mode = #tpu.pipeline_mode<synchronous>, transform_indices = @transform_1, window_bounds = array<i64: 4, 32, 32>}, {pipeline_mode = #tpu.pipeline_mode<synchronous>, transform_indices = @transform_2, window_bounds = array<i64: 4, 32, 8>}, {transform_indices = @transform_3, window_bounds = array<i64: 2, 8, 32>}]} {
    %c0 = arith.constant 0 : index
    %c0_0 = arith.constant 0 : index
    %c0_1 = arith.constant 0 : index
    %0 = vector.load %arg1[%c0, %c0_0, %c0_1] : memref<2x8x32xf32, #tpu.memory_space<vmem>>, vector<2x8x32xf32>
    %1 = vector.shape_cast %0 : vector<2x8x32xf32> to vector<1x2x8x32xf32>
    %2 = vector.shape_cast %1 : vector<1x2x8x32xf32> to vector<1x2x8x32xf32>
    %3 = vector.broadcast %2 : vector<1x2x8x32xf32> to vector<4x2x8x32xf32>
    %4 = vector.shape_cast %3 : vector<4x2x8x32xf32> to vector<8x8x32xf32>
    %c0_2 = arith.constant 0 : index
    %c0_3 = arith.constant 0 : index
    %c0_4 = arith.constant 0 : index
    %5 = vector.load %arg2[%c0_2, %c0_3, %c0_4] : memref<4x32x32xf32, #tpu.memory_space<vmem>>, vector<4x32x32xf32>
    %6 = vector.shape_cast %5 : vector<4x32x32xf32> to vector<4x1x32x32xf32>
    %7 = vector.shape_cast %6 : vector<4x1x32x32xf32> to vector<4x1x32x32xf32>
    %8 = vector.broadcast %7 : vector<4x1x32x32xf32> to vector<4x2x32x32xf32>
    %9 = vector.shape_cast %8 : vector<4x2x32x32xf32> to vector<8x32x32xf32>
    %c0_5 = arith.constant 0 : index
    %c0_6 = arith.constant 0 : index
    %c0_7 = arith.constant 0 : index
    %10 = vector.load %arg3[%c0_5, %c0_6, %c0_7] : memref<4x32x8xf32, #tpu.memory_space<vmem>>, vector<4x32x8xf32>
    %11 = vector.shape_cast %10 : vector<4x32x8xf32> to vector<4x1x32x8xf32>
    %12 = vector.shape_cast %11 : vector<4x1x32x8xf32> to vector<4x1x32x8xf32>
    %13 = vector.broadcast %12 : vector<4x1x32x8xf32> to vector<4x2x32x8xf32>
    %14 = vector.shape_cast %13 : vector<4x2x32x8xf32> to vector<8x32x8xf32>
    "tpu.trace_start"() <{level = 10 : i32, message = "gsd,gde->gse"}> : () -> ()
    %cst = arith.constant dense<0.000000e+00> : vector<8x8x32xf32>
    %15 = tpu.matmul %4, %9, %cst {dimension_numbers = #tpu.dot_dimension_numbers<[2], [1], [1], [2], [0, 0, 0, 1, 1, 2], [0], [0]>} : vector<8x8x32xf32>, vector<8x32x32xf32>, vector<8x8x32xf32> -> vector<8x8x32xf32>
    "tpu.trace_stop"() : () -> ()
    "tpu.trace_start"() <{level = 10 : i32, message = "gsd,gtd->gst"}> : () -> ()
    %cst_8 = arith.constant dense<0.000000e+00> : vector<8x8x8xf32>
    %16 = tpu.matmul %15, %4, %cst_8 {dimension_numbers = #tpu.dot_dimension_numbers<[2], [2], [1], [1], [0, 0, 0, 1, 1, 1], [0], [0]>} : vector<8x8x32xf32>, vector<8x8x32xf32>, vector<8x8x8xf32> -> vector<8x8x8xf32>
    "tpu.trace_stop"() : () -> ()
    %cst_9 = arith.constant dense<0xFF800000> : vector<8x8xf32>
    %17 = vector.multi_reduction <maximumf>, %16, %cst_9 [2] : vector<8x8x8xf32> to vector<8x8xf32>
    %18 = vector.shape_cast %17 : vector<8x8xf32> to vector<8x8x1xf32>
    %19 = vector.broadcast %18 : vector<8x8x1xf32> to vector<8x8x8xf32>
    %20 = arith.subf %16, %19 : vector<8x8x8xf32>
    %21 = math.exp %20 : vector<8x8x8xf32>
    %cst_10 = arith.constant dense<0.000000e+00> : vector<8x8xf32>
    %22 = vector.multi_reduction <add>, %21, %cst_10 [2] : vector<8x8x8xf32> to vector<8x8xf32>
    %23 = vector.shape_cast %22 : vector<8x8xf32> to vector<8x8x1xf32>
    %24 = tpu.reciprocal %23 {approx = true} : vector<8x8x1xf32> -> vector<8x8x1xf32>
    %25 = arith.mulf %23, %24 : vector<8x8x1xf32>
    %cst_11 = arith.constant 2.000000e+00 : f32
    %26 = vector.broadcast %cst_11 : f32 to vector<8x8x1xf32>
    %27 = arith.subf %26, %25 : vector<8x8x1xf32>
    %28 = arith.mulf %24, %27 : vector<8x8x1xf32>
    %29 = vector.broadcast %28 : vector<8x8x1xf32> to vector<8x8x8xf32>
    %30 = arith.mulf %21, %29 : vector<8x8x8xf32>
    "tpu.trace_start"() <{level = 10 : i32, message = "gst,gtd->gsd"}> : () -> ()
    %cst_12 = arith.constant dense<0.000000e+00> : vector<8x8x32xf32>
    %31 = tpu.matmul %30, %4, %cst_12 {dimension_numbers = #tpu.dot_dimension_numbers<[2], [1], [1], [2], [0, 0, 0, 1, 1, 2], [0], [0]>} : vector<8x8x8xf32>, vector<8x8x32xf32>, vector<8x8x32xf32> -> vector<8x8x32xf32>
    "tpu.trace_stop"() : () -> ()
    "tpu.trace_start"() <{level = 10 : i32, message = "gsd,gdk->gsk"}> : () -> ()
    %cst_13 = arith.constant dense<0.000000e+00> : vector<8x8x8xf32>
    %32 = tpu.matmul %31, %14, %cst_13 {dimension_numbers = #tpu.dot_dimension_numbers<[2], [1], [1], [2], [0, 0, 0, 1, 1, 2], [0], [0]>} : vector<8x8x32xf32>, vector<8x32x8xf32>, vector<8x8x8xf32> -> vector<8x8x8xf32>
    "tpu.trace_stop"() : () -> ()
    %33 = vector.shape_cast %32 : vector<8x8x8xf32> to vector<4x2x8x8xf32>
    %34 = vector.extract_strided_slice %33 {offsets = [0, 0, 0, 0], sizes = [1, 2, 8, 8], strides = [1, 1, 1, 1]} : vector<4x2x8x8xf32> to vector<1x2x8x8xf32>
    %35 = vector.shape_cast %34 : vector<1x2x8x8xf32> to vector<2x8x8xf32>
    %c0_14 = arith.constant 0 : index
    %c0_15 = arith.constant 0 : index
    %c0_16 = arith.constant 0 : index
    %36 = vector.load %arg4[%c0_14, %c0_15, %c0_16] : memref<2x8x32xf32, #tpu.memory_space<vmem>>, vector<2x8x8xf32>
    tpu.vector_store %arg4[%c0_14, %c0_15, %c0_16], %35 {strides = array<i32>} : memref<2x8x32xf32, #tpu.memory_space<vmem>>, vector<2x8x8xf32>,
    %37 = vector.extract_strided_slice %33 {offsets = [1, 0, 0, 0], sizes = [1, 2, 8, 8], strides = [1, 1, 1, 1]} : vector<4x2x8x8xf32> to vector<1x2x8x8xf32>
    %38 = vector.shape_cast %37 : vector<1x2x8x8xf32> to vector<2x8x8xf32>
    %c0_17 = arith.constant 0 : index
    %c0_18 = arith.constant 0 : index
    %c8 = arith.constant 8 : index
    %39 = vector.load %arg4[%c0_17, %c0_18, %c8] : memref<2x8x32xf32, #tpu.memory_space<vmem>>, vector<2x8x8xf32>
    tpu.vector_store %arg4[%c0_17, %c0_18, %c8], %38 {strides = array<i32>} : memref<2x8x32xf32, #tpu.memory_space<vmem>>, vector<2x8x8xf32>,
    %40 = vector.extract_strided_slice %33 {offsets = [2, 0, 0, 0], sizes = [1, 2, 8, 8], strides = [1, 1, 1, 1]} : vector<4x2x8x8xf32> to vector<1x2x8x8xf32>
    %41 = vector.shape_cast %40 : vector<1x2x8x8xf32> to vector<2x8x8xf32>
    %c0_19 = arith.constant 0 : index
    %c0_20 = arith.constant 0 : index
    %c16 = arith.constant 16 : index
    %42 = vector.load %arg4[%c0_19, %c0_20, %c16] : memref<2x8x32xf32, #tpu.memory_space<vmem>>, vector<2x8x8xf32>
    tpu.vector_store %arg4[%c0_19, %c0_20, %c16], %41 {strides = array<i32>} : memref<2x8x32xf32, #tpu.memory_space<vmem>>, vector<2x8x8xf32>,
    %43 = vector.extract_strided_slice %33 {offsets = [3, 0, 0, 0], sizes = [1, 2, 8, 8], strides = [1, 1, 1, 1]} : vector<4x2x8x8xf32> to vector<1x2x8x8xf32>
    %44 = vector.shape_cast %43 : vector<1x2x8x8xf32> to vector<2x8x8xf32>
    %c0_21 = arith.constant 0 : index
    %c0_22 = arith.constant 0 : index
    %c24 = arith.constant 24 : index
    %45 = vector.load %arg4[%c0_21, %c0_22, %c24] : memref<2x8x32xf32, #tpu.memory_space<vmem>>, vector<2x8x8xf32>
    tpu.vector_store %arg4[%c0_21, %c0_22, %c24], %44 {strides = array<i32>} : memref<2x8x32xf32, #tpu.memory_space<vmem>>, vector<2x8x8xf32>,
    return
  }
  func.func @transform_0(%arg0: i32) -> (i32, i32, i32) {
    %c0_i32 = arith.constant 0 : i32
    %c0_i32_0 = arith.constant 0 : i32
    %c0_i32_1 = arith.constant 0 : i32
    return %arg0, %c0_i32, %c0_i32_0 : i32, i32, i32
  }
  func.func @transform_1(%arg0: i32) -> (i32, i32, i32) {
    %c0_i32 = arith.constant 0 : i32
    %c0_i32_0 = arith.constant 0 : i32
    %c0_i32_1 = arith.constant 0 : i32
    %c0_i32_2 = arith.constant 0 : i32
    return %c0_i32, %c0_i32_0, %c0_i32_1 : i32, i32, i32
  }
  func.func @transform_2(%arg0: i32) -> (i32, i32, i32) {
    %c0_i32 = arith.constant 0 : i32
    %c0_i32_0 = arith.constant 0 : i32
    %c0_i32_1 = arith.constant 0 : i32
    %c0_i32_2 = arith.constant 0 : i32
    return %c0_i32, %c0_i32_0, %c0_i32_1 : i32, i32, i32
  }
  func.func @transform_3(%arg0: i32) -> (i32, i32, i32) {
    %c0_i32 = arith.constant 0 : i32
    %c0_i32_0 = arith.constant 0 : i32
    %c0_i32_1 = arith.constant 0 : i32
    return %arg0, %c0_i32, %c0_i32_0 : i32, i32, i32
  }
}

</mosaic_0001>

<llo_original>
// kernel: tpu_custom_call.1
$region0: #{tpu_custom_call.1}
  #allocation0 [shape = 'u32[]', space=smem, size = 0x4, offset = 0x4, fixed_abs, tag = 'smem constant byte address 0x4 - core index']
  #allocation1 [shape = 'u32[72,128]{1,0:T(1,128)}', space=vmem, size = 0x9000, scoped, tag = 'internal scratch']
  %s0 = inlined_call_operand.vmem [shape: f32[2,8,32], index: 0, kind: input, shape index: {}]
  %s1 = inlined_call_operand.vmem [shape: f32[4,32,32], index: 1, kind: input, shape index: {}]
  %s2 = inlined_call_operand.vmem [shape: f32[4,32,8], index: 2, kind: input, shape index: {}]
  %s3 = inlined_call_operand.hbm [shape: f32[2,8,32], index: 3, kind: output, shape index: {}]
  %s4 = sld [smem:[#allocation0]]
  $region22: #{tpu_custom_call.1} parent=0
    _
  %s6 = ssub.s32 1, %s4
  %s7 = scalar_select 0, %s6, %s4
  $region1: #{tpu_custom_call.1} parent=0
    #allocation2 [shape = 'u8[8192]{0}', space=vmem, size = 0x2000, scoped, tag = 'output window, operand 0, single buffered']
    #allocation3 [shape = 's32[1]{0}', space=sflag, size = 0x4, scoped, tag = 'scoped memory for tpu_custom_call.1']
    %8 = vsyncpa [#allocation3], 0
    // Predicated region
    $region2: #{tpu_custom_call.1} parent=1 // pred_check
      _
    $region3: #{tpu_custom_call.1} parent=1 // pred_check_branch
      %10 = sbr.rel (0) target = $region5
    $region4: #{tpu_custom_call.1} parent=1 // pred_region
      _
    $region5: #{tpu_custom_call.1} parent=1 // pred_fallthru
      _
    // Predicated region
    $region6: #{tpu_custom_call.1} parent=1 // pred_check
      _
    $region7: #{tpu_custom_call.1} parent=1 // pred_check_branch
      %12 = sbr.rel (0) target = $region9
    $region8: #{tpu_custom_call.1} parent=1 // pred_region
      _
    $region9: #{tpu_custom_call.1} parent=1 // pred_fallthru
      _
    // Predicated region
    $region10: #{tpu_custom_call.1} parent=1 // pred_check
      _
    $region11: #{tpu_custom_call.1} parent=1 // pred_check_branch
      %14 = sbr.rel (0) target = $region13
    $region12: #{tpu_custom_call.1} parent=1 // pred_region
      _
    $region13: #{tpu_custom_call.1} parent=1 // pred_fallthru
      _
    %v15 = vld [vmem:[%s0] sm:$0xff]
    %v16 = vld [vmem:[%s0 + $0x8] sm:$0xff]
    %v17 = vld [vmem:[%s1] sm:$0xff]
    %v18 = vld [vmem:[%s1 + $0x8] sm:$0xff]
    %v19 = vld [vmem:[%s1 + $0x10] sm:$0xff]
    %v20 = vld [vmem:[%s1 + $0x18] sm:$0xff]
    %v21 = vld [vmem:[%s1 + $0x20] sm:$0xff]
    %v22 = vld [vmem:[%s1 + $0x28] sm:$0xff]
    %v23 = vld [vmem:[%s1 + $0x30] sm:$0xff]
    %v24 = vld [vmem:[%s1 + $0x38] sm:$0xff]
    %v25 = vld [vmem:[%s1 + $0x40] sm:$0xff]
    %v26 = vld [vmem:[%s1 + $0x48] sm:$0xff]
    %v27 = vld [vmem:[%s1 + $0x50] sm:$0xff]
    %v28 = vld [vmem:[%s1 + $0x58] sm:$0xff]
    %v29 = vld [vmem:[%s1 + $0x60] sm:$0xff]
    %v30 = vld [vmem:[%s1 + $0x68] sm:$0xff]
    %v31 = vld [vmem:[%s1 + $0x70] sm:$0xff]
    %v32 = vld [vmem:[%s1 + $0x78] sm:$0xff]
    %v33 = vld [vmem:[%s2] sm:$0xff]
    %v34 = vld [vmem:[%s2 + $0x8] sm:$0xff]
    %v35 = vld [vmem:[%s2 + $0x10] sm:$0xff]
    %v36 = vld [vmem:[%s2 + $0x18] sm:$0xff]
    %v37 = vld [vmem:[%s2 + $0x20] sm:$0xff]
    %v38 = vld [vmem:[%s2 + $0x28] sm:$0xff]
    %v39 = vld [vmem:[%s2 + $0x30] sm:$0xff]
    %v40 = vld [vmem:[%s2 + $0x38] sm:$0xff]
    %v41 = vld [vmem:[%s2 + $0x40] sm:$0xff]
    %v42 = vld [vmem:[%s2 + $0x48] sm:$0xff]
    %v43 = vld [vmem:[%s2 + $0x50] sm:$0xff]
    %v44 = vld [vmem:[%s2 + $0x58] sm:$0xff]
    %v45 = vld [vmem:[%s2 + $0x60] sm:$0xff]
    %v46 = vld [vmem:[%s2 + $0x68] sm:$0xff]
    %v47 = vld [vmem:[%s2 + $0x70] sm:$0xff]
    %v48 = vld [vmem:[%s2 + $0x78] sm:$0xff]
    %vm49 = vcmask 261120
    %v51 = vsel %vm49, %v15, 0
    %53 = vmatpush.msra.mxu0 0.0
    %54 = vmatpush.msra.mxu0 0.0
    %55 = vmatpush.msra.mxu0 0.0
    %56 = vmatpush.msra.mxu0 0.0
    %57 = vmatpush.msra.mxu0 0.0
    %58 = vmatpush.msra.mxu0 0.0
    %59 = vmatpush.msra.mxu0 0.0
    %60 = vmatpush.msra.mxu0 0.0
    %61 = vmatpush.msra.mxu0 0.0
    %62 = vmatpush.msra.mxu0 0.0
    %63 = vmatpush.msra.mxu0 0.0
    %64 = vmatpush.msra.mxu0 0.0
    %65 = vmatpush.msra.mxu0 %v20
    %66 = vmatpush.msra.mxu0 %v19
    %67 = vmatpush.msra.mxu0 %v18
    %68 = vmatpush.msra.mxu0 %v17
    %69 = vmatmul.f32.gmra.mxu0 %v51
    %v70 = vpop.f32.mrf.mxu0
    %v71 = vadd.f32 0.0, %v70
    %72 = vdwg.mxu0
    %v74 = vsel %vm49, %v16, 0
    %76 = vmatpush.msra.mxu0 0.0
    %77 = vmatpush.msra.mxu0 0.0
    %78 = vmatpush.msra.mxu0 0.0
    %79 = vmatpush.msra.mxu0 0.0
    %80 = vmatpush.msra.mxu0 0.0
    %81 = vmatpush.msra.mxu0 0.0
    %82 = vmatpush.msra.mxu0 0.0
    %83 = vmatpush.msra.mxu0 0.0
    %84 = vmatpush.msra.mxu0 0.0
    %85 = vmatpush.msra.mxu0 0.0
    %86 = vmatpush.msra.mxu0 0.0
    %87 = vmatpush.msra.mxu0 0.0
    %88 = vmatpush.msra.mxu0 %v20
    %89 = vmatpush.msra.mxu0 %v19
    %90 = vmatpush.msra.mxu0 %v18
    %91 = vmatpush.msra.mxu0 %v17
    %92 = vmatmul.f32.gmra.mxu0 %v74
    %v93 = vpop.f32.mrf.mxu0
    %v94 = vadd.f32 0.0, %v93
    %95 = vdwg.mxu0
    %96 = vmatpush.msra.mxu0 0.0
    %97 = vmatpush.msra.mxu0 0.0
    %98 = vmatpush.msra.mxu0 0.0
    %99 = vmatpush.msra.mxu0 0.0
    %100 = vmatpush.msra.mxu0 0.0
    %101 = vmatpush.msra.mxu0 0.0
    %102 = vmatpush.msra.mxu0 0.0
    %103 = vmatpush.msra.mxu0 0.0
    %104 = vmatpush.msra.mxu0 0.0
    %105 = vmatpush.msra.mxu0 0.0
    %106 = vmatpush.msra.mxu0 0.0
    %107 = vmatpush.msra.mxu0 0.0
    %108 = vmatpush.msra.mxu0 %v24
    %109 = vmatpush.msra.mxu0 %v23
    %110 = vmatpush.msra.mxu0 %v22
    %111 = vmatpush.msra.mxu0 %v21
    %112 = vmatmul.f32.gmra.mxu0 %v51
    %v113 = vpop.f32.mrf.mxu0
    %v114 = vadd.f32 0.0, %v113
    %115 = vdwg.mxu0
    %116 = vmatpush.msra.mxu0 0.0
    %117 = vmatpush.msra.mxu0 0.0
    %118 = vmatpush.msra.mxu0 0.0
    %119 = vmatpush.msra.mxu0 0.0
    %120 = vmatpush.msra.mxu0 0.0
    %121 = vmatpush.msra.mxu0 0.0
    %122 = vmatpush.msra.mxu0 0.0
    %123 = vmatpush.msra.mxu0 0.0
    %124 = vmatpush.msra.mxu0 0.0
    %125 = vmatpush.msra.mxu0 0.0
    %126 = vmatpush.msra.mxu0 0.0
    %127 = vmatpush.msra.mxu0 0.0
    %128 = vmatpush.msra.mxu0 %v24
    %129 = vmatpush.msra.mxu0 %v23
    %130 = vmatpush.msra.mxu0 %v22
    %131 = vmatpush.msra.mxu0 %v21
    %132 = vmatmul.f32.gmra.mxu0 %v74
    %v133 = vpop.f32.mrf.mxu0
    %v134 = vadd.f32 0.0, %v133
    %135 = vdwg.mxu0
    %136 = vmatpush.msra.mxu0 0.0
    %137 = vmatpush.msra.mxu0 0.0
    %138 = vmatpush.msra.mxu0 0.0
    %139 = vmatpush.msra.mxu0 0.0
    %140 = vmatpush.msra.mxu0 0.0
    %141 = vmatpush.msra.mxu0 0.0
    %142 = vmatpush.msra.mxu0 0.0
    %143 = vmatpush.msra.mxu0 0.0
    %144 = vmatpush.msra.mxu0 0.0
    %145 = vmatpush.msra.mxu0 0.0
    %146 = vmatpush.msra.mxu0 0.0
    %147 = vmatpush.msra.mxu0 0.0
    %148 = vmatpush.msra.mxu0 %v28
    %149 = vmatpush.msra.mxu0 %v27
    %150 = vmatpush.msra.mxu0 %v26
    %151 = vmatpush.msra.mxu0 %v25
    %152 = vmatmul.f32.gmra.mxu0 %v51
    %v153 = vpop.f32.mrf.mxu0
    %v154 = vadd.f32 0.0, %v153
    %155 = vdwg.mxu0
    %156 = vmatpush.msra.mxu0 0.0
    %157 = vmatpush.msra.mxu0 0.0
    %158 = vmatpush.msra.mxu0 0.0
    %159 = vmatpush.msra.mxu0 0.0
    %160 = vmatpush.msra.mxu0 0.0
    %161 = vmatpush.msra.mxu0 0.0
    %162 = vmatpush.msra.mxu0 0.0
    %163 = vmatpush.msra.mxu0 0.0
    %164 = vmatpush.msra.mxu0 0.0
    %165 = vmatpush.msra.mxu0 0.0
    %166 = vmatpush.msra.mxu0 0.0
    %167 = vmatpush.msra.mxu0 0.0
    %168 = vmatpush.msra.mxu0 %v28
    %169 = vmatpush.msra.mxu0 %v27
    %170 = vmatpush.msra.mxu0 %v26
    %171 = vmatpush.msra.mxu0 %v25
    %172 = vmatmul.f32.gmra.mxu0 %v74
    %v173 = vpop.f32.mrf.mxu0
    %v174 = vadd.f32 0.0, %v173
    %175 = vdwg.mxu0
    %176 = vmatpush.msra.mxu0 0.0
    %177 = vmatpush.msra.mxu0 0.0
    %178 = vmatpush.msra.mxu0 0.0
    %179 = vmatpush.msra.mxu0 0.0
    %180 = vmatpush.msra.mxu0 0.0
    %181 = vmatpush.msra.mxu0 0.0
    %182 = vmatpush.msra.mxu0 0.0
    %183 = vmatpush.msra.mxu0 0.0
    %184 = vmatpush.msra.mxu0 0.0
    %185 = vmatpush.msra.mxu0 0.0
    %186 = vmatpush.msra.mxu0 0.0
    %187 = vmatpush.msra.mxu0 0.0
    %188 = vmatpush.msra.mxu0 %v32
    %189 = vmatpush.msra.mxu0 %v31
    %190 = vmatpush.msra.mxu0 %v30
    %191 = vmatpush.msra.mxu0 %v29
    %192 = vmatmul.f32.gmra.mxu0 %v51
    %v193 = vpop.f32.mrf.mxu0
    %v194 = vadd.f32 0.0, %v193
    %195 = vdwg.mxu0
    %196 = vmatpush.msra.mxu0 0.0
    %197 = vmatpush.msra.mxu0 0.0
    %198 = vmatpush.msra.mxu0 0.0
    %199 = vmatpush.msra.mxu0 0.0
    %200 = vmatpush.msra.mxu0 0.0
    %201 = vmatpush.msra.mxu0 0.0
    %202 = vmatpush.msra.mxu0 0.0
    %203 = vmatpush.msra.mxu0 0.0
    %204 = vmatpush.msra.mxu0 0.0
    %205 = vmatpush.msra.mxu0 0.0
    %206 = vmatpush.msra.mxu0 0.0
    %207 = vmatpush.msra.mxu0 0.0
    %208 = vmatpush.msra.mxu0 %v32
    %209 = vmatpush.msra.mxu0 %v31
    %210 = vmatpush.msra.mxu0 %v30
    %211 = vmatpush.msra.mxu0 %v29
    %212 = vmatmul.f32.gmra.mxu0 %v74
    %v213 = vpop.f32.mrf.mxu0
    %v214 = vadd.f32 0.0, %v213
    %215 = vdwg.mxu0
    %v217 = vsel %vm49, %v71, 0
    %219 = vmatpush.xpose.msra.mxu0 0.0
    %220 = vmatpush.xpose.msra.mxu0 0.0
    %221 = vmatpush.xpose.msra.mxu0 0.0
    %222 = vmatpush.xpose.msra.mxu0 0.0
    %223 = vmatpush.xpose.msra.mxu0 0.0
    %224 = vmatpush.xpose.msra.mxu0 0.0
    %225 = vmatpush.xpose.msra.mxu0 0.0
    %226 = vmatpush.xpose.msra.mxu0 0.0
    %227 = vmatpush.xpose.msra.mxu0 0.0
    %228 = vmatpush.xpose.msra.mxu0 0.0
    %229 = vmatpush.xpose.msra.mxu0 0.0
    %230 = vmatpush.xpose.msra.mxu0 0.0
    %231 = vmatpush.xpose.msra.mxu0 0.0
    %232 = vmatpush.xpose.msra.mxu0 0.0
    %233 = vmatpush.xpose.msra.mxu0 0.0
    %234 = vmatpush.xpose.msra.mxu0 %v51
    %235 = vmatmul.f32.gmra.mxu0 %v217
    %v236 = vpop.f32.mrf.mxu0
    %v237 = vadd.f32 0.0, %v236
    %238 = vdwg.mxu0
    %v240 = vsel %vm49, %v94, 0
    %242 = vmatpush.xpose.msra.mxu0 0.0
    %243 = vmatpush.xpose.msra.mxu0 0.0
    %244 = vmatpush.xpose.msra.mxu0 0.0
    %245 = vmatpush.xpose.msra.mxu0 0.0
    %246 = vmatpush.xpose.msra.mxu0 0.0
    %247 = vmatpush.xpose.msra.mxu0 0.0
    %248 = vmatpush.xpose.msra.mxu0 0.0
    %249 = vmatpush.xpose.msra.mxu0 0.0
    %250 = vmatpush.xpose.msra.mxu0 0.0
    %251 = vmatpush.xpose.msra.mxu0 0.0
    %252 = vmatpush.xpose.msra.mxu0 0.0
    %253 = vmatpush.xpose.msra.mxu0 0.0
    %254 = vmatpush.xpose.msra.mxu0 0.0
    %255 = vmatpush.xpose.msra.mxu0 0.0
    %256 = vmatpush.xpose.msra.mxu0 0.0
    %257 = vmatpush.xpose.msra.mxu0 %v74
    %258 = vmatmul.f32.gmra.mxu0 %v240
    %v259 = vpop.f32.mrf.mxu0
    %v260 = vadd.f32 0.0, %v259
    %261 = vdwg.mxu0
    %v263 = vsel %vm49, %v114, 0
    %265 = vmatpush.xpose.msra.mxu0 0.0
    %266 = vmatpush.xpose.msra.mxu0 0.0
    %267 = vmatpush.xpose.msra.mxu0 0.0
    %268 = vmatpush.xpose.msra.mxu0 0.0
    %269 = vmatpush.xpose.msra.mxu0 0.0
    %270 = vmatpush.xpose.msra.mxu0 0.0
    %271 = vmatpush.xpose.msra.mxu0 0.0
    %272 = vmatpush.xpose.msra.mxu0 0.0
    %273 = vmatpush.xpose.msra.mxu0 0.0
    %274 = vmatpush.xpose.msra.mxu0 0.0
    %275 = vmatpush.xpose.msra.mxu0 0.0
    %276 = vmatpush.xpose.msra.mxu0 0.0
    %277 = vmatpush.xpose.msra.mxu0 0.0
    %278 = vmatpush.xpose.msra.mxu0 0.0
    %279 = vmatpush.xpose.msra.mxu0 0.0
    %280 = vmatpush.xpose.msra.mxu0 %v51
    %281 = vmatmul.f32.gmra.mxu0 %v263
    %v282 = vpop.f32.mrf.mxu0
    %v283 = vadd.f32 0.0, %v282
    %284 = vdwg.mxu0
    %v286 = vsel %vm49, %v134, 0
    %288 = vmatpush.xpose.msra.mxu0 0.0
    %289 = vmatpush.xpose.msra.mxu0 0.0
    %290 = vmatpush.xpose.msra.mxu0 0.0
    %291 = vmatpush.xpose.msra.mxu0 0.0
    %292 = vmatpush.xpose.msra.mxu0 0.0
    %293 = vmatpush.xpose.msra.mxu0 0.0
    %294 = vmatpush.xpose.msra.mxu0 0.0
    %295 = vmatpush.xpose.msra.mxu0 0.0
    %296 = vmatpush.xpose.msra.mxu0 0.0
    %297 = vmatpush.xpose.msra.mxu0 0.0
    %298 = vmatpush.xpose.msra.mxu0 0.0
    %299 = vmatpush.xpose.msra.mxu0 0.0
    %300 = vmatpush.xpose.msra.mxu0 0.0
    %301 = vmatpush.xpose.msra.mxu0 0.0
    %302 = vmatpush.xpose.msra.mxu0 0.0
    %303 = vmatpush.xpose.msra.mxu0 %v74
    %304 = vmatmul.f32.gmra.mxu0 %v286
    %v305 = vpop.f32.mrf.mxu0
    %v306 = vadd.f32 0.0, %v305
    %307 = vdwg.mxu0
    %v309 = vsel %vm49, %v154, 0
    %311 = vmatpush.xpose.msra.mxu0 0.0
    %312 = vmatpush.xpose.msra.mxu0 0.0
    %313 = vmatpush.xpose.msra.mxu0 0.0
    %314 = vmatpush.xpose.msra.mxu0 0.0
    %315 = vmatpush.xpose.msra.mxu0 0.0
    %316 = vmatpush.xpose.msra.mxu0 0.0
    %317 = vmatpush.xpose.msra.mxu0 0.0
    %318 = vmatpush.xpose.msra.mxu0 0.0
    %319 = vmatpush.xpose.msra.mxu0 0.0
    %320 = vmatpush.xpose.msra.mxu0 0.0
    %321 = vmatpush.xpose.msra.mxu0 0.0
    %322 = vmatpush.xpose.msra.mxu0 0.0
    %323 = vmatpush.xpose.msra.mxu0 0.0
    %324 = vmatpush.xpose.msra.mxu0 0.0
    %325 = vmatpush.xpose.msra.mxu0 0.0
    %326 = vmatpush.xpose.msra.mxu0 %v51
    %327 = vmatmul.f32.gmra.mxu0 %v309
    %v328 = vpop.f32.mrf.mxu0
    %v329 = vadd.f32 0.0, %v328
    %330 = vdwg.mxu0
    %v332 = vsel %vm49, %v174, 0
    %334 = vmatpush.xpose.msra.mxu0 0.0
    %335 = vmatpush.xpose.msra.mxu0 0.0
    %336 = vmatpush.xpose.msra.mxu0 0.0
    %337 = vmatpush.xpose.msra.mxu0 0.0
    %338 = vmatpush.xpose.msra.mxu0 0.0
    %339 = vmatpush.xpose.msra.mxu0 0.0
    %340 = vmatpush.xpose.msra.mxu0 0.0
    %341 = vmatpush.xpose.msra.mxu0 0.0
    %342 = vmatpush.xpose.msra.mxu0 0.0
    %343 = vmatpush.xpose.msra.mxu0 0.0
    %344 = vmatpush.xpose.msra.mxu0 0.0
    %345 = vmatpush.xpose.msra.mxu0 0.0
    %346 = vmatpush.xpose.msra.mxu0 0.0
    %347 = vmatpush.xpose.msra.mxu0 0.0
    %348 = vmatpush.xpose.msra.mxu0 0.0
    %349 = vmatpush.xpose.msra.mxu0 %v74
    %350 = vmatmul.f32.gmra.mxu0 %v332
    %v351 = vpop.f32.mrf.mxu0
    %v352 = vadd.f32 0.0, %v351
    %353 = vdwg.mxu0
    %v355 = vsel %vm49, %v194, 0
    %357 = vmatpush.xpose.msra.mxu0 0.0
    %358 = vmatpush.xpose.msra.mxu0 0.0
    %359 = vmatpush.xpose.msra.mxu0 0.0
    %360 = vmatpush.xpose.msra.mxu0 0.0
    %361 = vmatpush.xpose.msra.mxu0 0.0
    %362 = vmatpush.xpose.msra.mxu0 0.0
    %363 = vmatpush.xpose.msra.mxu0 0.0
    %364 = vmatpush.xpose.msra.mxu0 0.0
    %365 = vmatpush.xpose.msra.mxu0 0.0
    %366 = vmatpush.xpose.msra.mxu0 0.0
    %367 = vmatpush.xpose.msra.mxu0 0.0
    %368 = vmatpush.xpose.msra.mxu0 0.0
    %369 = vmatpush.xpose.msra.mxu0 0.0
    %370 = vmatpush.xpose.msra.mxu0 0.0
    %371 = vmatpush.xpose.msra.mxu0 0.0
    %372 = vmatpush.xpose.msra.mxu0 %v51
    %373 = vmatmul.f32.gmra.mxu0 %v355
    %v374 = vpop.f32.mrf.mxu0
    %v375 = vadd.f32 0.0, %v374
    %376 = vdwg.mxu0
    %v378 = vsel %vm49, %v214, 0
    %380 = vmatpush.xpose.msra.mxu0 0.0
    %381 = vmatpush.xpose.msra.mxu0 0.0
    %382 = vmatpush.xpose.msra.mxu0 0.0
    %383 = vmatpush.xpose.msra.mxu0 0.0
    %384 = vmatpush.xpose.msra.mxu0 0.0
    %385 = vmatpush.xpose.msra.mxu0 0.0
    %386 = vmatpush.xpose.msra.mxu0 0.0
    %387 = vmatpush.xpose.msra.mxu0 0.0
    %388 = vmatpush.xpose.msra.mxu0 0.0
    %389 = vmatpush.xpose.msra.mxu0 0.0
    %390 = vmatpush.xpose.msra.mxu0 0.0
    %391 = vmatpush.xpose.msra.mxu0 0.0
    %392 = vmatpush.xpose.msra.mxu0 0.0
    %393 = vmatpush.xpose.msra.mxu0 0.0
    %394 = vmatpush.xpose.msra.mxu0 0.0
    %395 = vmatpush.xpose.msra.mxu0 %v74
    %396 = vmatmul.f32.gmra.mxu0 %v378
    %v397 = vpop.f32.mrf.mxu0
    %v398 = vadd.f32 0.0, %v397
    %399 = vdwg.mxu0
    %vm400 = vcmask 64512
    %v401 = vsel %vm400, %v237, -inf
    %402 = vmax.xlane.f32.xlu0 %v401
    %v403 = vpop.xlane.xlu0 %402
    %v404 = vsel %vm400, %v260, -inf
    %405 = vmax.xlane.f32.xlu0 %v404
    %v406 = vpop.xlane.xlu0 %405
    %v407 = vsel %vm400, %v283, -inf
    %408 = vmax.xlane.f32.xlu0 %v407
    %v409 = vpop.xlane.xlu0 %408
    %v410 = vsel %vm400, %v306, -inf
    %411 = vmax.xlane.f32.xlu0 %v410
    %v412 = vpop.xlane.xlu0 %411
    %v413 = vsel %vm400, %v329, -inf
    %414 = vmax.xlane.f32.xlu0 %v413
    %v415 = vpop.xlane.xlu0 %414
    %v416 = vsel %vm400, %v352, -inf
    %417 = vmax.xlane.f32.xlu0 %v416
    %v418 = vpop.xlane.xlu0 %417
    %v419 = vsel %vm400, %v375, -inf
    %420 = vmax.xlane.f32.xlu0 %v419
    %v421 = vpop.xlane.xlu0 %420
    %v422 = vsel %vm400, %v398, -inf
    %423 = vmax.xlane.f32.xlu0 %v422
    %v424 = vpop.xlane.xlu0 %423
    %v425 = vsub.f32 %v237, %v403
    %v426 = vsub.f32 %v260, %v406
    %v427 = vsub.f32 %v283, %v409
    %v428 = vsub.f32 %v306, %v412
    %v429 = vsub.f32 %v329, %v415
    %v430 = vsub.f32 %v352, %v418
    %v431 = vsub.f32 %v375, %v421
    %v432 = vsub.f32 %v398, %v424
    %v433 = vmul.f32 %v425, 1.442695
    %v434 = vpow.pop %v433
    %v435 = vmul.f32 %v426, 1.442695
    %v436 = vpow.pop %v435
    %v437 = vmul.f32 %v427, 1.442695
    %v438 = vpow.pop %v437
    %v439 = vmul.f32 %v428, 1.442695
    %v440 = vpow.pop %v439
    %v441 = vmul.f32 %v429, 1.442695
    %v442 = vpow.pop %v441
    %v443 = vmul.f32 %v430, 1.442695
    %v444 = vpow.pop %v443
    %v445 = vmul.f32 %v431, 1.442695
    %v446 = vpow.pop %v445
    %v447 = vmul.f32 %v432, 1.442695
    %v448 = vpow.pop %v447
    %v449 = vsel %vm400, %v434, 0.0
    %450 = vadd.xlane.f32.xlu0 %v449
    %v451 = vpop.xlane.xlu0 %450
    %v452 = vsel %vm400, %v436, 0.0
    %453 = vadd.xlane.f32.xlu0 %v452
    %v454 = vpop.xlane.xlu0 %453
    %v455 = vsel %vm400, %v438, 0.0
    %456 = vadd.xlane.f32.xlu0 %v455
    %v457 = vpop.xlane.xlu0 %456
    %v458 = vsel %vm400, %v440, 0.0
    %459 = vadd.xlane.f32.xlu0 %v458
    %v460 = vpop.xlane.xlu0 %459
    %v461 = vsel %vm400, %v442, 0.0
    %462 = vadd.xlane.f32.xlu0 %v461
    %v463 = vpop.xlane.xlu0 %462
    %v464 = vsel %vm400, %v444, 0.0
    %465 = vadd.xlane.f32.xlu0 %v464
    %v466 = vpop.xlane.xlu0 %465
    %v467 = vsel %vm400, %v446, 0.0
    %468 = vadd.xlane.f32.xlu0 %v467
    %v469 = vpop.xlane.xlu0 %468
    %v470 = vsel %vm400, %v448, 0.0
    %471 = vadd.xlane.f32.xlu0 %v470
    %v472 = vpop.xlane.xlu0 %471
    %v473 = vrcp.pop %v451
    %v474 = vrcp.pop %v454
    %v475 = vrcp.pop %v457
    %v476 = vrcp.pop %v460
    %v477 = vrcp.pop %v463
    %v478 = vrcp.pop %v466
    %v479 = vrcp.pop %v469
    %v480 = vrcp.pop %v472
    %v481 = vmul.f32 %v451, %v473
    %v482 = vmul.f32 %v454, %v474
    %v483 = vmul.f32 %v457, %v475
    %v484 = vmul.f32 %v460, %v476
    %v485 = vmul.f32 %v463, %v477
    %v486 = vmul.f32 %v466, %v478
    %v487 = vmul.f32 %v469, %v479
    %v488 = vmul.f32 %v472, %v480
    %v489 = vsub.f32 2.0, %v481
    %v490 = vsub.f32 2.0, %v482
    %v491 = vsub.f32 2.0, %v483
    %v492 = vsub.f32 2.0, %v484
    %v493 = vsub.f32 2.0, %v485
    %v494 = vsub.f32 2.0, %v486
    %v495 = vsub.f32 2.0, %v487
    %v496 = vsub.f32 2.0, %v488
    %v497 = vmul.f32 %v473, %v489
    %v498 = vmul.f32 %v474, %v490
    %v499 = vmul.f32 %v475, %v491
    %v500 = vmul.f32 %v476, %v492
    %v501 = vmul.f32 %v477, %v493
    %v502 = vmul.f32 %v478, %v494
    %v503 = vmul.f32 %v479, %v495
    %v504 = vmul.f32 %v480, %v496
    %v505 = vmul.f32 %v434, %v497
    %v506 = vmul.f32 %v436, %v498
    %v507 = vmul.f32 %v438, %v499
    %v508 = vmul.f32 %v440, %v500
    %v509 = vmul.f32 %v442, %v501
    %v510 = vmul.f32 %v444, %v502
    %v511 = vmul.f32 %v446, %v503
    %v512 = vmul.f32 %v448, %v504
    %v514 = vsel %vm400, %v505, 0
    %516 = vmatpush.msra.mxu0 0.0
    %517 = vmatpush.msra.mxu0 0.0
    %518 = vmatpush.msra.mxu0 0.0
    %519 = vmatpush.msra.mxu0 0.0
    %520 = vmatpush.msra.mxu0 0.0
    %521 = vmatpush.msra.mxu0 0.0
    %522 = vmatpush.msra.mxu0 0.0
    %523 = vmatpush.msra.mxu0 0.0
    %524 = vmatpush.msra.mxu0 0.0
    %525 = vmatpush.msra.mxu0 0.0
    %526 = vmatpush.msra.mxu0 0.0
    %527 = vmatpush.msra.mxu0 0.0
    %528 = vmatpush.msra.mxu0 0.0
    %529 = vmatpush.msra.mxu0 0.0
    %530 = vmatpush.msra.mxu0 0.0
    %531 = vmatpush.msra.mxu0 %v15
    %532 = vmatmul.f32.gmra.mxu0 %v514
    %v533 = vpop.f32.mrf.mxu0
    %v534 = vadd.f32 0.0, %v533
    %535 = vdwg.mxu0
    %v537 = vsel %vm400, %v506, 0
    %539 = vmatpush.msra.mxu0 0.0
    %540 = vmatpush.msra.mxu0 0.0
    %541 = vmatpush.msra.mxu0 0.0
    %542 = vmatpush.msra.mxu0 0.0
    %543 = vmatpush.msra.mxu0 0.0
    %544 = vmatpush.msra.mxu0 0.0
    %545 = vmatpush.msra.mxu0 0.0
    %546 = vmatpush.msra.mxu0 0.0
    %547 = vmatpush.msra.mxu0 0.0
    %548 = vmatpush.msra.mxu0 0.0
    %549 = vmatpush.msra.mxu0 0.0
    %550 = vmatpush.msra.mxu0 0.0
    %551 = vmatpush.msra.mxu0 0.0
    %552 = vmatpush.msra.mxu0 0.0
    %553 = vmatpush.msra.mxu0 0.0
    %554 = vmatpush.msra.mxu0 %v16
    %555 = vmatmul.f32.gmra.mxu0 %v537
    %v556 = vpop.f32.mrf.mxu0
    %v557 = vadd.f32 0.0, %v556
    %558 = vdwg.mxu0
    %v560 = vsel %vm400, %v507, 0
    %562 = vmatpush.msra.mxu0 0.0
    %563 = vmatpush.msra.mxu0 0.0
    %564 = vmatpush.msra.mxu0 0.0
    %565 = vmatpush.msra.mxu0 0.0
    %566 = vmatpush.msra.mxu0 0.0
    %567 = vmatpush.msra.mxu0 0.0
    %568 = vmatpush.msra.mxu0 0.0
    %569 = vmatpush.msra.mxu0 0.0
    %570 = vmatpush.msra.mxu0 0.0
    %571 = vmatpush.msra.mxu0 0.0
    %572 = vmatpush.msra.mxu0 0.0
    %573 = vmatpush.msra.mxu0 0.0
    %574 = vmatpush.msra.mxu0 0.0
    %575 = vmatpush.msra.mxu0 0.0
    %576 = vmatpush.msra.mxu0 0.0
    %577 = vmatpush.msra.mxu0 %v15
    %578 = vmatmul.f32.gmra.mxu0 %v560
    %v579 = vpop.f32.mrf.mxu0
    %v580 = vadd.f32 0.0, %v579
    %581 = vdwg.mxu0
    %v583 = vsel %vm400, %v508, 0
    %585 = vmatpush.msra.mxu0 0.0
    %586 = vmatpush.msra.mxu0 0.0
    %587 = vmatpush.msra.mxu0 0.0
    %588 = vmatpush.msra.mxu0 0.0
    %589 = vmatpush.msra.mxu0 0.0
    %590 = vmatpush.msra.mxu0 0.0
    %591 = vmatpush.msra.mxu0 0.0
    %592 = vmatpush.msra.mxu0 0.0
    %593 = vmatpush.msra.mxu0 0.0
    %594 = vmatpush.msra.mxu0 0.0
    %595 = vmatpush.msra.mxu0 0.0
    %596 = vmatpush.msra.mxu0 0.0
    %597 = vmatpush.msra.mxu0 0.0
    %598 = vmatpush.msra.mxu0 0.0
    %599 = vmatpush.msra.mxu0 0.0
    %600 = vmatpush.msra.mxu0 %v16
    %601 = vmatmul.f32.gmra.mxu0 %v583
    %v602 = vpop.f32.mrf.mxu0
    %v603 = vadd.f32 0.0, %v602
    %604 = vdwg.mxu0
    %v606 = vsel %vm400, %v509, 0
    %608 = vmatpush.msra.mxu0 0.0
    %609 = vmatpush.msra.mxu0 0.0
    %610 = vmatpush.msra.mxu0 0.0
    %611 = vmatpush.msra.mxu0 0.0
    %612 = vmatpush.msra.mxu0 0.0
    %613 = vmatpush.msra.mxu0 0.0
    %614 = vmatpush.msra.mxu0 0.0
    %615 = vmatpush.msra.mxu0 0.0
    %616 = vmatpush.msra.mxu0 0.0
    %617 = vmatpush.msra.mxu0 0.0
    %618 = vmatpush.msra.mxu0 0.0
    %619 = vmatpush.msra.mxu0 0.0
    %620 = vmatpush.msra.mxu0 0.0
    %621 = vmatpush.msra.mxu0 0.0
    %622 = vmatpush.msra.mxu0 0.0
    %623 = vmatpush.msra.mxu0 %v15
    %624 = vmatmul.f32.gmra.mxu0 %v606
    %v625 = vpop.f32.mrf.mxu0
    %v626 = vadd.f32 0.0, %v625
    %627 = vdwg.mxu0
    %v629 = vsel %vm400, %v510, 0
    %631 = vmatpush.msra.mxu0 0.0
    %632 = vmatpush.msra.mxu0 0.0
    %633 = vmatpush.msra.mxu0 0.0
    %634 = vmatpush.msra.mxu0 0.0
    %635 = vmatpush.msra.mxu0 0.0
    %636 = vmatpush.msra.mxu0 0.0
    %637 = vmatpush.msra.mxu0 0.0
    %638 = vmatpush.msra.mxu0 0.0
    %639 = vmatpush.msra.mxu0 0.0
    %640 = vmatpush.msra.mxu0 0.0
    %641 = vmatpush.msra.mxu0 0.0
    %642 = vmatpush.msra.mxu0 0.0
    %643 = vmatpush.msra.mxu0 0.0
    %644 = vmatpush.msra.mxu0 0.0
    %645 = vmatpush.msra.mxu0 0.0
    %646 = vmatpush.msra.mxu0 %v16
    %647 = vmatmul.f32.gmra.mxu0 %v629
    %v648 = vpop.f32.mrf.mxu0
    %v649 = vadd.f32 0.0, %v648
    %650 = vdwg.mxu0
    %v652 = vsel %vm400, %v511, 0
    %654 = vmatpush.msra.mxu0 0.0
    %655 = vmatpush.msra.mxu0 0.0
    %656 = vmatpush.msra.mxu0 0.0
    %657 = vmatpush.msra.mxu0 0.0
    %658 = vmatpush.msra.mxu0 0.0
    %659 = vmatpush.msra.mxu0 0.0
    %660 = vmatpush.msra.mxu0 0.0
    %661 = vmatpush.msra.mxu0 0.0
    %662 = vmatpush.msra.mxu0 0.0
    %663 = vmatpush.msra.mxu0 0.0
    %664 = vmatpush.msra.mxu0 0.0
    %665 = vmatpush.msra.mxu0 0.0
    %666 = vmatpush.msra.mxu0 0.0
    %667 = vmatpush.msra.mxu0 0.0
    %668 = vmatpush.msra.mxu0 0.0
    %669 = vmatpush.msra.mxu0 %v15
    %670 = vmatmul.f32.gmra.mxu0 %v652
    %v671 = vpop.f32.mrf.mxu0
    %v672 = vadd.f32 0.0, %v671
    %673 = vdwg.mxu0
    %v675 = vsel %vm400, %v512, 0
    %677 = vmatpush.msra.mxu0 0.0
    %678 = vmatpush.msra.mxu0 0.0
    %679 = vmatpush.msra.mxu0 0.0
    %680 = vmatpush.msra.mxu0 0.0
    %681 = vmatpush.msra.mxu0 0.0
    %682 = vmatpush.msra.mxu0 0.0
    %683 = vmatpush.msra.mxu0 0.0
    %684 = vmatpush.msra.mxu0 0.0
    %685 = vmatpush.msra.mxu0 0.0
    %686 = vmatpush.msra.mxu0 0.0
    %687 = vmatpush.msra.mxu0 0.0
    %688 = vmatpush.msra.mxu0 0.0
    %689 = vmatpush.msra.mxu0 0.0
    %690 = vmatpush.msra.mxu0 0.0
    %691 = vmatpush.msra.mxu0 0.0
    %692 = vmatpush.msra.mxu0 %v16
    %693 = vmatmul.f32.gmra.mxu0 %v675
    %v694 = vpop.f32.mrf.mxu0
    %v695 = vadd.f32 0.0, %v694
    %696 = vdwg.mxu0
    %v698 = vsel %vm49, %v534, 0
    %700 = vmatpush.msra.mxu0 0.0
    %701 = vmatpush.msra.mxu0 0.0
    %702 = vmatpush.msra.mxu0 0.0
    %703 = vmatpush.msra.mxu0 0.0
    %704 = vmatpush.msra.mxu0 0.0
    %705 = vmatpush.msra.mxu0 0.0
    %706 = vmatpush.msra.mxu0 0.0
    %707 = vmatpush.msra.mxu0 0.0
    %708 = vmatpush.msra.mxu0 0.0
    %709 = vmatpush.msra.mxu0 0.0
    %710 = vmatpush.msra.mxu0 0.0
    %711 = vmatpush.msra.mxu0 0.0
    %712 = vmatpush.msra.mxu0 %v36
    %713 = vmatpush.msra.mxu0 %v35
    %714 = vmatpush.msra.mxu0 %v34
    %715 = vmatpush.msra.mxu0 %v33
    %716 = vmatmul.f32.gmra.mxu0 %v698
    %v717 = vpop.f32.mrf.mxu0
    %v718 = vadd.f32 0.0, %v717
    %719 = vdwg.mxu0
    %v721 = vsel %vm49, %v557, 0
    %723 = vmatpush.msra.mxu0 0.0
    %724 = vmatpush.msra.mxu0 0.0
    %725 = vmatpush.msra.mxu0 0.0
    %726 = vmatpush.msra.mxu0 0.0
    %727 = vmatpush.msra.mxu0 0.0
    %728 = vmatpush.msra.mxu0 0.0
    %729 = vmatpush.msra.mxu0 0.0
    %730 = vmatpush.msra.mxu0 0.0
    %731 = vmatpush.msra.mxu0 0.0
    %732 = vmatpush.msra.mxu0 0.0
    %733 = vmatpush.msra.mxu0 0.0
    %734 = vmatpush.msra.mxu0 0.0
    %735 = vmatpush.msra.mxu0 %v36
    %736 = vmatpush.msra.mxu0 %v35
    %737 = vmatpush.msra.mxu0 %v34
    %738 = vmatpush.msra.mxu0 %v33
    %739 = vmatmul.f32.gmra.mxu0 %v721
    %v740 = vpop.f32.mrf.mxu0
    %v741 = vadd.f32 0.0, %v740
    %742 = vdwg.mxu0
    %v744 = vsel %vm49, %v580, 0
    %746 = vmatpush.msra.mxu0 0.0
    %747 = vmatpush.msra.mxu0 0.0
    %748 = vmatpush.msra.mxu0 0.0
    %749 = vmatpush.msra.mxu0 0.0
    %750 = vmatpush.msra.mxu0 0.0
    %751 = vmatpush.msra.mxu0 0.0
    %752 = vmatpush.msra.mxu0 0.0
    %753 = vmatpush.msra.mxu0 0.0
    %754 = vmatpush.msra.mxu0 0.0
    %755 = vmatpush.msra.mxu0 0.0
    %756 = vmatpush.msra.mxu0 0.0
    %757 = vmatpush.msra.mxu0 0.0
    %758 = vmatpush.msra.mxu0 %v40
    %759 = vmatpush.msra.mxu0 %v39
    %760 = vmatpush.msra.mxu0 %v38
    %761 = vmatpush.msra.mxu0 %v37
    %762 = vmatmul.f32.gmra.mxu0 %v744
    %v763 = vpop.f32.mrf.mxu0
    %v764 = vadd.f32 0.0, %v763
    %765 = vdwg.mxu0
    %v767 = vsel %vm49, %v603, 0
    %769 = vmatpush.msra.mxu0 0.0
    %770 = vmatpush.msra.mxu0 0.0
    %771 = vmatpush.msra.mxu0 0.0
    %772 = vmatpush.msra.mxu0 0.0
    %773 = vmatpush.msra.mxu0 0.0
    %774 = vmatpush.msra.mxu0 0.0
    %775 = vmatpush.msra.mxu0 0.0
    %776 = vmatpush.msra.mxu0 0.0
    %777 = vmatpush.msra.mxu0 0.0
    %778 = vmatpush.msra.mxu0 0.0
    %779 = vmatpush.msra.mxu0 0.0
    %780 = vmatpush.msra.mxu0 0.0
    %781 = vmatpush.msra.mxu0 %v40
    %782 = vmatpush.msra.mxu0 %v39
    %783 = vmatpush.msra.mxu0 %v38
    %784 = vmatpush.msra.mxu0 %v37
    %785 = vmatmul.f32.gmra.mxu0 %v767
    %v786 = vpop.f32.mrf.mxu0
    %v787 = vadd.f32 0.0, %v786
    %788 = vdwg.mxu0
    %v790 = vsel %vm49, %v626, 0
    %792 = vmatpush.msra.mxu0 0.0
    %793 = vmatpush.msra.mxu0 0.0
    %794 = vmatpush.msra.mxu0 0.0
    %795 = vmatpush.msra.mxu0 0.0
    %796 = vmatpush.msra.mxu0 0.0
    %797 = vmatpush.msra.mxu0 0.0
    %798 = vmatpush.msra.mxu0 0.0
    %799 = vmatpush.msra.mxu0 0.0
    %800 = vmatpush.msra.mxu0 0.0
    %801 = vmatpush.msra.mxu0 0.0
    %802 = vmatpush.msra.mxu0 0.0
    %803 = vmatpush.msra.mxu0 0.0
    %804 = vmatpush.msra.mxu0 %v44
    %805 = vmatpush.msra.mxu0 %v43
    %806 = vmatpush.msra.mxu0 %v42
    %807 = vmatpush.msra.mxu0 %v41
    %808 = vmatmul.f32.gmra.mxu0 %v790
    %v809 = vpop.f32.mrf.mxu0
    %v810 = vadd.f32 0.0, %v809
    %811 = vdwg.mxu0
    %v813 = vsel %vm49, %v649, 0
    %815 = vmatpush.msra.mxu0 0.0
    %816 = vmatpush.msra.mxu0 0.0
    %817 = vmatpush.msra.mxu0 0.0
    %818 = vmatpush.msra.mxu0 0.0
    %819 = vmatpush.msra.mxu0 0.0
    %820 = vmatpush.msra.mxu0 0.0
    %821 = vmatpush.msra.mxu0 0.0
    %822 = vmatpush.msra.mxu0 0.0
    %823 = vmatpush.msra.mxu0 0.0
    %824 = vmatpush.msra.mxu0 0.0
    %825 = vmatpush.msra.mxu0 0.0
    %826 = vmatpush.msra.mxu0 0.0
    %827 = vmatpush.msra.mxu0 %v44
    %828 = vmatpush.msra.mxu0 %v43
    %829 = vmatpush.msra.mxu0 %v42
    %830 = vmatpush.msra.mxu0 %v41
    %831 = vmatmul.f32.gmra.mxu0 %v813
    %v832 = vpop.f32.mrf.mxu0
    %v833 = vadd.f32 0.0, %v832
    %834 = vdwg.mxu0
    %v836 = vsel %vm49, %v672, 0
    %838 = vmatpush.msra.mxu0 0.0
    %839 = vmatpush.msra.mxu0 0.0
    %840 = vmatpush.msra.mxu0 0.0
    %841 = vmatpush.msra.mxu0 0.0
    %842 = vmatpush.msra.mxu0 0.0
    %843 = vmatpush.msra.mxu0 0.0
    %844 = vmatpush.msra.mxu0 0.0
    %845 = vmatpush.msra.mxu0 0.0
    %846 = vmatpush.msra.mxu0 0.0
    %847 = vmatpush.msra.mxu0 0.0
    %848 = vmatpush.msra.mxu0 0.0
    %849 = vmatpush.msra.mxu0 0.0
    %850 = vmatpush.msra.mxu0 %v48
    %851 = vmatpush.msra.mxu0 %v47
    %852 = vmatpush.msra.mxu0 %v46
    %853 = vmatpush.msra.mxu0 %v45
    %854 = vmatmul.f32.gmra.mxu0 %v836
    %v855 = vpop.f32.mrf.mxu0
    %v856 = vadd.f32 0.0, %v855
    %857 = vdwg.mxu0
    %v859 = vsel %vm49, %v695, 0
    %861 = vmatpush.msra.mxu0 0.0
    %862 = vmatpush.msra.mxu0 0.0
    %863 = vmatpush.msra.mxu0 0.0
    %864 = vmatpush.msra.mxu0 0.0
    %865 = vmatpush.msra.mxu0 0.0
    %866 = vmatpush.msra.mxu0 0.0
    %867 = vmatpush.msra.mxu0 0.0
    %868 = vmatpush.msra.mxu0 0.0
    %869 = vmatpush.msra.mxu0 0.0
    %870 = vmatpush.msra.mxu0 0.0
    %871 = vmatpush.msra.mxu0 0.0
    %872 = vmatpush.msra.mxu0 0.0
    %873 = vmatpush.msra.mxu0 %v48
    %874 = vmatpush.msra.mxu0 %v47
    %875 = vmatpush.msra.mxu0 %v46
    %876 = vmatpush.msra.mxu0 %v45
    %877 = vmatmul.f32.gmra.mxu0 %v859
    %v878 = vpop.f32.mrf.mxu0
    %v879 = vadd.f32 0.0, %v878
    %880 = vdwg.mxu0
    %881 = vst.msk [vmem:[#allocation2] sm:$0xff] %vm400, %v718
    %882 = vst.msk [vmem:[#allocation2 + $0x8] sm:$0xff] %vm400, %v741
    %885 = vrot.lane.b32.xlu0 %v764, 8
    %v886 = vpop.permute.xlu0 %885
    %887 = vrot.lane.b32.xlu0 %v787, 8
    %v888 = vpop.permute.xlu0 %887
    %vm891 = vcmask 130112
    %892 = vst.msk [vmem:[#allocation2] sm:$0xff] %vm891, %v886
    %893 = vst.msk [vmem:[#allocation2 + $0x8] sm:$0xff] %vm891, %v888
    %896 = vrot.lane.b32.xlu0 %v810, 16
    %v897 = vpop.permute.xlu0 %896
    %898 = vrot.lane.b32.xlu0 %v833, 16
    %v899 = vpop.permute.xlu0 %898
    %vm902 = vcmask 195712
    %903 = vst.msk [vmem:[#allocation2] sm:$0xff] %vm902, %v897
    %904 = vst.msk [vmem:[#allocation2 + $0x8] sm:$0xff] %vm902, %v899
    %907 = vrot.lane.b32.xlu0 %v856, 24
    %v908 = vpop.permute.xlu0 %907
    %909 = vrot.lane.b32.xlu0 %v879, 24
    %v910 = vpop.permute.xlu0 %909
    %vm913 = vcmask 261312
    %914 = vst.msk [vmem:[#allocation2] sm:$0xff] %vm913, %v908
    %915 = vst.msk [vmem:[#allocation2 + $0x8] sm:$0xff] %vm913, %v910
    // Predicated region
    $region14: #{tpu_custom_call.1} parent=1 // pred_check
      _
    $region15: #{tpu_custom_call.1} parent=1 // pred_check_branch
      %917 = sbr.rel (0) target = $region17
    $region16: #{tpu_custom_call.1} parent=1 // pred_region
      %919 = vsyncadd [#allocation3], 0
      %s920 = sshll.u32 [#allocation2], 4
      %s921 = int_to_ptr.vmem [resolvable:$true] %s920
      %s922 = sshll.u32 %s3, 4
      %s923 = int_to_ptr.hbm [resolvable:$true] %s922
      %928 = dma.vmem_to_hbm [thread:$0]  %s921, 256, %s923, [#allocation3], 128, 128, 8
    $region17: #{tpu_custom_call.1} parent=1 // pred_fallthru
      _
    // Predicated region
    $region18: #{tpu_custom_call.1} parent=1 // pred_check
      _
    $region19: #{tpu_custom_call.1} parent=1 // pred_check_branch
      %930 = sbr.rel (0) target = $region21
    $region20: #{tpu_custom_call.1} parent=1 // pred_region
      %932 = dma.done [#allocation3], 256
    $region21: #{tpu_custom_call.1} parent=1 // pred_fallthru
      _
    %933 = vsyncpa [#allocation3], 1

</llo_original>
